<compile_context>
chip_gen: v6e
topology: v6e:2x2x1
jax: 0.10.0
libtpu: 0.0.40
codegen_flags: <defaults>
</compile_context>

<pallas_src>
import jax
import jax.numpy as jnp
from jax.experimental import pallas as pl
from jax.experimental.pallas import tpu as pltpu


def mlp_kernel(x_ref, w1_ref, b1_ref, w2_ref, b2_ref, w3_ref, b3_ref, o_ref):
    # Layer 1: x @ W1 + b1, ReLU   (f32 MXU accumulate)
    h1 = jnp.dot(x_ref[...], w1_ref[...], preferred_element_type=jnp.float32)
    h1 = jnp.maximum(h1 + b1_ref[...], 0.0)
    # Layer 2: h1 @ W2 + b2, ReLU  (cast back to operand dtype so bf16 params hit bf16 MXU)
    h2 = jnp.dot(h1.astype(w2_ref.dtype), w2_ref[...], preferred_element_type=jnp.float32)
    h2 = jnp.maximum(h2 + b2_ref[...], 0.0)
    # Layer 3: h2 @ W3 + b3 (no activation)
    out = jnp.dot(h2.astype(w3_ref.dtype), w3_ref[...], preferred_element_type=jnp.float32)
    o_ref[...] = (out + b3_ref[...]).astype(o_ref.dtype)


def _round_up(n, m):
    return ((n + m - 1) // m) * m


def make_neural_net(w1, b1, w2, b2, w3, b3, *, batch_tile=512,
                    param_dtype=jnp.float32, out_dtype=jnp.float32,
                    force_tiled=False, small_batch_limit=512):
    """Prepare (cast/pad) the parameters ONCE and return a forward(x) callable.

    Padding to lane/sublane grain is mathematically inert (zeros) and happens here,
    not per forward call.  `forward` picks a no-padding single-tile path for tiny
    shapes, or a batch-tiled path for larger ones.
    """
    in_f, hid1 = w1.shape
    hid2 = w2.shape[1]
    n_cls = w3.shape[1]

    small_features = (max(in_f, hid1, hid2, n_cls) <= 128) and (not force_tiled)

    # Raw (unpadded) parameters for the small single-tile path.  Biases stay f32
    # (added to the f32 accumulator); weights/x may be cast (e.g. bf16 on v6e/v7x).
    w1s, w2s, w3s = (w.astype(param_dtype) for w in (w1, w2, w3))
    b1f, b2f, b3f = (b.astype(jnp.float32) for b in (b1, b2, b3))

    # Padded parameters for the tiled path — materialized exactly once, here.
    in_p = _round_up(in_f, 128)
    h1_p = _round_up(hid1, 128)
    h2_p = _round_up(hid2, 128)
    out_p = _round_up(n_cls, 128)
    w1p = jnp.pad(w1s, ((0, in_p - in_f), (0, h1_p - hid1)))
    b1p = jnp.pad(b1f, ((0, 0), (0, h1_p - hid1)))
    w2p = jnp.pad(w2s, ((0, h1_p - hid1), (0, h2_p - hid2)))
    b2p = jnp.pad(b2f, ((0, 0), (0, h2_p - hid2)))
    w3p = jnp.pad(w3s, ((0, h2_p - hid2), (0, out_p - n_cls)))
    b3p = jnp.pad(b3f, ((0, 0), (0, out_p - n_cls)))

    w_isz = jnp.dtype(param_dtype).itemsize
    o_isz = jnp.dtype(out_dtype).itemsize

    def _const_spec(shape, single_buffer):
        # Constant index_map -> block DMA'd once, resident in VMEM.  With a constant
        # block, double buffering is pure VMEM waste, so request a single buffer
        # (important for v7x's 64 MiB VMEM).  Fall back cleanly if unsupported.
        idx = lambda i: (0, 0)
        if single_buffer:
            try:
                return pl.BlockSpec(shape, idx, pipeline_mode=pl.Buffered(1))
            except (TypeError, AttributeError):
                pass
        return pl.BlockSpec(shape, idx)

    def _forward_small(x):
        # grid=(1,), block_shape == full array dims (allowed regardless of (8,128)
        # grain), no padding / slicing at all: at these sizes the kernel is pure
        # fixed overhead and the pad/slice HLOs would dominate wall clock.
        B = x.shape[0]
        cost = pl.CostEstimate(
            flops=2 * B * (in_f * hid1 + hid1 * hid2 + hid2 * n_cls),
            transcendentals=0,
            bytes_accessed=int(
                w_isz * (B * in_f + in_f * hid1 + hid1 * hid2 + hid2 * n_cls)
                + 4 * (hid1 + hid2 + n_cls) + o_isz * B * n_cls),
        )
        return pl.pallas_call(
            mlp_kernel,
            out_shape=jax.ShapeDtypeStruct((B, n_cls), out_dtype),
            grid_spec=pl.GridSpec(
                grid=(1,),
                in_specs=[
                    pl.BlockSpec((B, in_f), lambda i: (0, 0)),
                    pl.BlockSpec((in_f, hid1), lambda i: (0, 0)),
                    pl.BlockSpec((1, hid1), lambda i: (0, 0)),
                    pl.BlockSpec((hid1, hid2), lambda i: (0, 0)),
                    pl.BlockSpec((1, hid2), lambda i: (0, 0)),
                    pl.BlockSpec((hid2, n_cls), lambda i: (0, 0)),
                    pl.BlockSpec((1, n_cls), lambda i: (0, 0)),
                ],
                out_specs=pl.BlockSpec((B, n_cls), lambda i: (0, 0)),
            ),
            cost_estimate=cost,
        )(x.astype(param_dtype), w1s, b1f, w2s, b2f, w3s, b3f)

    def _forward_tiled(x):
        B = x.shape[0]
        # Large batch tiles amortize per-step overhead; x and the output are the
        # only streaming arrays, weights stay resident across the whole grid.
        tm = batch_tile if B >= batch_tile else _round_up(B, 8)
        b_p = _round_up(B, tm)
        xp = jnp.pad(x.astype(param_dtype), ((0, b_p - B), (0, in_p - in_f)))

        cost = pl.CostEstimate(
            flops=2 * b_p * (in_p * h1_p + h1_p * h2_p + h2_p * out_p),
            transcendentals=0,
            bytes_accessed=int(
                w_isz * (b_p * in_p + in_p * h1_p + h1_p * h2_p + h2_p * out_p)
                + 4 * (h1_p + h2_p + out_p) + o_isz * b_p * out_p),
        )

        def run(single_buffer):
            call = pl.pallas_call(
                mlp_kernel,
                out_shape=jax.ShapeDtypeStruct((b_p, out_p), out_dtype),
                grid_spec=pl.GridSpec(
                    grid=(b_p // tm,),
                    in_specs=[
                        # x: streams per batch tile.
                        pl.BlockSpec((tm, in_p), lambda i: (i, 0)),
                        # Weights/biases: resident, single-buffered when possible.
                        _const_spec((in_p, h1_p), single_buffer),
                        _const_spec((1, h1_p), single_buffer),
                        _const_spec((h1_p, h2_p), single_buffer),
                        _const_spec((1, h2_p), single_buffer),
                        _const_spec((h2_p, out_p), single_buffer),
                        _const_spec((1, out_p), single_buffer),
                    ],
                    # Lane-dense output slab, tiled over batch.
                    out_specs=pl.BlockSpec((tm, out_p), lambda i: (i, 0)),
                ),
                compiler_params=pltpu.CompilerParams(
                    dimension_semantics=("parallel",)),
                cost_estimate=cost,
            )
            return call(xp, w1p, b1p, w2p, b2p, w3p, b3p)

        try:
            out = run(True)
        except Exception:
            # Fallback if this JAX/Mosaic build rejects pl.Buffered(1).
            out = run(False)
        return out[:B, :n_cls]

    def forward(x):
        if small_features and x.shape[0] <= small_batch_limit:
            return _forward_small(x)
        return _forward_tiled(x)

    return forward


def init_params(key, input_size, hidden_size, num_classes):
    # Deterministic synthetic init (mimics nn.Linear's uniform(-1/sqrt(fan_in), ...)).
    # TODO(synk): the original module loads trained weights from data.pth; we
    # synthesize them in-script since no external data may be read.
    ks = jax.random.split(key, 6)

    def linear(kw, kb, fan_in, fan_out):
        bound = 1.0 / jnp.sqrt(fan_in)
        w = jax.random.uniform(kw, (fan_in, fan_out), jnp.float32, -bound, bound)
        b = jax.random.uniform(kb, (1, fan_out), jnp.float32, -bound, bound)
        return w, b

    w1, b1 = linear(ks[0], ks[1], input_size, hidden_size)
    w2, b2 = linear(ks[2], ks[3], hidden_size, hidden_size)
    w3, b3 = linear(ks[4], ks[5], hidden_size, num_classes)
    return w1, b1, w2, b2, w3, b3


if __name__ == "__main__":
    # Small shapes consistent with the module (bag-of-words intent classifier style).
    batch = 2
    input_size = 32
    hidden_size = 32
    num_classes = 8

    key = jax.random.PRNGKey(0)
    k_x, k_p = jax.random.split(key)
    x = jax.random.normal(k_x, (batch, input_size), jnp.float32)
    params = init_params(k_p, input_size, hidden_size, num_classes)
    w1, b1, w2, b2, w3, b3 = params

    def ref_fn(xx):
        r = jnp.maximum(xx @ w1 + b1, 0.0)
        r = jnp.maximum(r @ w2 + b2, 0.0)
        return r @ w3 + b3

    ref = ref_fn(x)

    # Path A: tiny-shape fast path (no padding, grid of 1) — taken automatically here.
    forward_small = make_neural_net(*params)
    out_small = jax.block_until_ready(forward_small(x))
    assert out_small.shape == (batch, num_classes)
    assert jnp.allclose(out_small, ref, atol=1e-5, rtol=1e-5), "small-path mismatch"

    # Path B: general padded / batch-tiled path (forced, to exercise it on-device too).
    forward_tiled = make_neural_net(*params, force_tiled=True, batch_tile=8)
    out_tiled = jax.block_until_ready(forward_tiled(x))
    assert out_tiled.shape == (batch, num_classes)
    assert jnp.allclose(out_tiled, ref, atol=1e-5, rtol=1e-5), "tiled-path mismatch"

    print("KERNEL_OK")
</pallas_src>

<mosaic_0001>
module attributes {stable_mosaic.version = 11 : i64} {
  func.func @mlp_kernel(%arg0: i32, %arg1: memref<2x32xf32, #tpu.memory_space<vmem>>, %arg2: memref<32x32xf32, #tpu.memory_space<vmem>>, %arg3: memref<1x32xf32, #tpu.memory_space<vmem>>, %arg4: memref<32x32xf32, #tpu.memory_space<vmem>>, %arg5: memref<1x32xf32, #tpu.memory_space<vmem>>, %arg6: memref<32x8xf32, #tpu.memory_space<vmem>>, %arg7: memref<1x8xf32, #tpu.memory_space<vmem>>, %arg8: memref<2x8xf32, #tpu.memory_space<vmem>>) attributes {dimension_semantics = [#tpu.dimension_semantics<arbitrary>], iteration_bounds = array<i64: 1>, scalar_prefetch = 0 : i64, scratch_operands = 0 : i64, tpu.core_type = #tpu.core_type<tc>, window_params = [{pipeline_mode = #tpu.pipeline_mode<synchronous>, transform_indices = @transform_0, window_bounds = array<i64: 2, 32>}, {pipeline_mode = #tpu.pipeline_mode<synchronous>, transform_indices = @transform_1, window_bounds = array<i64: 32, 32>}, {pipeline_mode = #tpu.pipeline_mode<synchronous>, transform_indices = @transform_2, window_bounds = array<i64: 1, 32>}, {pipeline_mode = #tpu.pipeline_mode<synchronous>, transform_indices = @transform_3, window_bounds = array<i64: 32, 32>}, {pipeline_mode = #tpu.pipeline_mode<synchronous>, transform_indices = @transform_4, window_bounds = array<i64: 1, 32>}, {pipeline_mode = #tpu.pipeline_mode<synchronous>, transform_indices = @transform_5, window_bounds = array<i64: 32, 8>}, {pipeline_mode = #tpu.pipeline_mode<synchronous>, transform_indices = @transform_6, window_bounds = array<i64: 1, 8>}, {pipeline_mode = #tpu.pipeline_mode<synchronous>, transform_indices = @transform_7, window_bounds = array<i64: 2, 8>}]} {
    %c0 = arith.constant 0 : index
    %c0_0 = arith.constant 0 : index
    %0 = vector.load %arg1[%c0, %c0_0] : memref<2x32xf32, #tpu.memory_space<vmem>>, vector<2x32xf32>
    %c0_1 = arith.constant 0 : index
    %c0_2 = arith.constant 0 : index
    %1 = vector.load %arg2[%c0_1, %c0_2] : memref<32x32xf32, #tpu.memory_space<vmem>>, vector<32x32xf32>
    %cst = arith.constant dense<0.000000e+00> : vector<2x32xf32>
    %2 = tpu.matmul %0, %1, %cst {dimension_numbers = #tpu.dot_dimension_numbers<[1], [0], [0], [1], [0, 0, 1, 1], [], []>} : vector<2x32xf32>, vector<32x32xf32>, vector<2x32xf32> -> vector<2x32xf32>
    %c0_3 = arith.constant 0 : index
    %c0_4 = arith.constant 0 : index
    %3 = vector.load %arg3[%c0_3, %c0_4] : memref<1x32xf32, #tpu.memory_space<vmem>>, vector<1x32xf32>
    %4 = vector.broadcast %3 : vector<1x32xf32> to vector<2x32xf32>
    %5 = arith.addf %2, %4 : vector<2x32xf32>
    %cst_5 = arith.constant 0.000000e+00 : f32
    %6 = vector.broadcast %cst_5 : f32 to vector<2x32xf32>
    %7 = arith.maximumf %5, %6 : vector<2x32xf32>
    %c0_6 = arith.constant 0 : index
    %c0_7 = arith.constant 0 : index
    %8 = vector.load %arg4[%c0_6, %c0_7] : memref<32x32xf32, #tpu.memory_space<vmem>>, vector<32x32xf32>
    %cst_8 = arith.constant dense<0.000000e+00> : vector<2x32xf32>
    %9 = tpu.matmul %7, %8, %cst_8 {dimension_numbers = #tpu.dot_dimension_numbers<[1], [0], [0], [1], [0, 0, 1, 1], [], []>} : vector<2x32xf32>, vector<32x32xf32>, vector<2x32xf32> -> vector<2x32xf32>
    %c0_9 = arith.constant 0 : index
    %c0_10 = arith.constant 0 : index
    %10 = vector.load %arg5[%c0_9, %c0_10] : memref<1x32xf32, #tpu.memory_space<vmem>>, vector<1x32xf32>
    %11 = vector.broadcast %10 : vector<1x32xf32> to vector<2x32xf32>
    %12 = arith.addf %9, %11 : vector<2x32xf32>
    %cst_11 = arith.constant 0.000000e+00 : f32
    %13 = vector.broadcast %cst_11 : f32 to vector<2x32xf32>
    %14 = arith.maximumf %12, %13 : vector<2x32xf32>
    %c0_12 = arith.constant 0 : index
    %c0_13 = arith.constant 0 : index
    %15 = vector.load %arg6[%c0_12, %c0_13] : memref<32x8xf32, #tpu.memory_space<vmem>>, vector<32x8xf32>
    %cst_14 = arith.constant dense<0.000000e+00> : vector<2x8xf32>
    %16 = tpu.matmul %14, %15, %cst_14 {dimension_numbers = #tpu.dot_dimension_numbers<[1], [0], [0], [1], [0, 0, 1, 1], [], []>} : vector<2x32xf32>, vector<32x8xf32>, vector<2x8xf32> -> vector<2x8xf32>
    %c0_15 = arith.constant 0 : index
    %c0_16 = arith.constant 0 : index
    %17 = vector.load %arg7[%c0_15, %c0_16] : memref<1x8xf32, #tpu.memory_space<vmem>>, vector<1x8xf32>
    %18 = vector.broadcast %17 : vector<1x8xf32> to vector<2x8xf32>
    %19 = arith.addf %16, %18 : vector<2x8xf32>
    %c0_17 = arith.constant 0 : index
    %c0_18 = arith.constant 0 : index
    %20 = vector.load %arg8[%c0_17, %c0_18] : memref<2x8xf32, #tpu.memory_space<vmem>>, vector<2x8xf32>
    tpu.vector_store %arg8[%c0_17, %c0_18], %19 {strides = array<i32>} : memref<2x8xf32, #tpu.memory_space<vmem>>, vector<2x8xf32>,
    return
  }
  func.func @transform_0(%arg0: i32) -> (i32, i32) {
    %c0_i32 = arith.constant 0 : i32
    %c0_i32_0 = arith.constant 0 : i32
    %c0_i32_1 = arith.constant 0 : i32
    return %c0_i32, %c0_i32_0 : i32, i32
  }
  func.func @transform_1(%arg0: i32) -> (i32, i32) {
    %c0_i32 = arith.constant 0 : i32
    %c0_i32_0 = arith.constant 0 : i32
    %c0_i32_1 = arith.constant 0 : i32
    return %c0_i32, %c0_i32_0 : i32, i32
  }
  func.func @transform_2(%arg0: i32) -> (i32, i32) {
    %c0_i32 = arith.constant 0 : i32
    %c0_i32_0 = arith.constant 0 : i32
    %c0_i32_1 = arith.constant 0 : i32
    return %c0_i32, %c0_i32_0 : i32, i32
  }
  func.func @transform_3(%arg0: i32) -> (i32, i32) {
    %c0_i32 = arith.constant 0 : i32
    %c0_i32_0 = arith.constant 0 : i32
    %c0_i32_1 = arith.constant 0 : i32
    return %c0_i32, %c0_i32_0 : i32, i32
  }
  func.func @transform_4(%arg0: i32) -> (i32, i32) {
    %c0_i32 = arith.constant 0 : i32
    %c0_i32_0 = arith.constant 0 : i32
    %c0_i32_1 = arith.constant 0 : i32
    return %c0_i32, %c0_i32_0 : i32, i32
  }
  func.func @transform_5(%arg0: i32) -> (i32, i32) {
    %c0_i32 = arith.constant 0 : i32
    %c0_i32_0 = arith.constant 0 : i32
    %c0_i32_1 = arith.constant 0 : i32
    return %c0_i32, %c0_i32_0 : i32, i32
  }
  func.func @transform_6(%arg0: i32) -> (i32, i32) {
    %c0_i32 = arith.constant 0 : i32
    %c0_i32_0 = arith.constant 0 : i32
    %c0_i32_1 = arith.constant 0 : i32
    return %c0_i32, %c0_i32_0 : i32, i32
  }
  func.func @transform_7(%arg0: i32) -> (i32, i32) {
    %c0_i32 = arith.constant 0 : i32
    %c0_i32_0 = arith.constant 0 : i32
    %c0_i32_1 = arith.constant 0 : i32
    return %c0_i32, %c0_i32_0 : i32, i32
  }
}

</mosaic_0001>

<llo_original>
// kernel: tpu_custom_call.1
$region0: #{tpu_custom_call.1}
  #allocation0 [shape = 'u32[]', space=smem, size = 0x4, offset = 0x4, fixed_abs, tag = 'smem constant byte address 0x4 - core index']
  #allocation1 [shape = 'u32[144,128]{1,0:T(1,128)}', space=vmem, size = 0x12000, scoped, tag = 'internal scratch']
  %s0 = inlined_call_operand.vmem [shape: f32[2,32], index: 0, kind: input, shape index: {}]
  %s1 = inlined_call_operand.vmem [shape: f32[32,32], index: 1, kind: input, shape index: {}]
  %s2 = inlined_call_operand.vmem [shape: f32[1,32], index: 2, kind: input, shape index: {}]
  %s3 = inlined_call_operand.hbm [shape: f32[32,32], index: 3, kind: input, shape index: {}]
  %s4 = inlined_call_operand.vmem [shape: f32[1,32], index: 4, kind: input, shape index: {}]
  %s5 = inlined_call_operand.vmem [shape: f32[32,8], index: 5, kind: input, shape index: {}]
  %s6 = inlined_call_operand.vmem [shape: f32[1,8], index: 6, kind: input, shape index: {}]
  %s7 = inlined_call_operand.hbm [shape: f32[2,8], index: 7, kind: output, shape index: {}]
  %s8 = sld [smem:[#allocation0]]
  $region42: #{tpu_custom_call.1} parent=0
    _
  %s10 = ssub.s32 1, %s8
  %s11 = scalar_select 0, %s10, %s8
  $region1: #{tpu_custom_call.1} parent=0
    #allocation2 [shape = 'u8[16384]{0}', space=vmem, size = 0x4000, scoped, tag = 'input window, operand 3, single buffered']
    #allocation3 [shape = 's32[1]{0}', space=sflag, size = 0x4, scoped, tag = 'scoped memory for tpu_custom_call.1']
    #allocation4 [shape = 's32[1]{0}', space=sflag, size = 0x4, scoped, tag = 'scoped memory for tpu_custom_call.1']
    #allocation5 [shape = 'u8[1024]{0}', space=vmem, size = 0x400, scoped, tag = 'output window, operand 0, single buffered']
    %12 = vsyncpa [#allocation3], 0
    %13 = vsyncpa [#allocation4], 0
    // Predicated region
    $region2: #{tpu_custom_call.1} parent=1 // pred_check
      _
    $region3: #{tpu_custom_call.1} parent=1 // pred_check_branch
      %15 = sbr.rel (0) target = $region5
    $region4: #{tpu_custom_call.1} parent=1 // pred_region
      _
    $region5: #{tpu_custom_call.1} parent=1 // pred_fallthru
      _
    // Predicated region
    $region6: #{tpu_custom_call.1} parent=1 // pred_check
      _
    $region7: #{tpu_custom_call.1} parent=1 // pred_check_branch
      %17 = sbr.rel (0) target = $region9
    $region8: #{tpu_custom_call.1} parent=1 // pred_region
      _
    $region9: #{tpu_custom_call.1} parent=1 // pred_fallthru
      _
    // Predicated region
    $region10: #{tpu_custom_call.1} parent=1 // pred_check
      _
    $region11: #{tpu_custom_call.1} parent=1 // pred_check_branch
      %19 = sbr.rel (0) target = $region13
    $region12: #{tpu_custom_call.1} parent=1 // pred_region
      _
    $region13: #{tpu_custom_call.1} parent=1 // pred_fallthru
      _
    // Predicated region
    $region14: #{tpu_custom_call.1} parent=1 // pred_check
      _
    $region15: #{tpu_custom_call.1} parent=1 // pred_check_branch
      %21 = sbr.rel (0) target = $region17
    $region16: #{tpu_custom_call.1} parent=1 // pred_region
      %s23 = ssub.s32 512, 512
      %24 = vsyncadd [#allocation3], %s23
      %s25 = sshll.u32 [#allocation2], 4
      %s26 = int_to_ptr.vmem [resolvable:$true] %s25
      %31 = dma.hbm_to_vmem [thread:$0]  %s3, 512, %s26, [#allocation3], 128, 128, 8
    $region17: #{tpu_custom_call.1} parent=1 // pred_fallthru
      _
    // Predicated region
    $region18: #{tpu_custom_call.1} parent=1 // pred_check
      _
    $region19: #{tpu_custom_call.1} parent=1 // pred_check_branch
      %33 = sbr.rel (0) target = $region21
    $region20: #{tpu_custom_call.1} parent=1 // pred_region
      _
    $region21: #{tpu_custom_call.1} parent=1 // pred_fallthru
      _
    // Predicated region
    $region22: #{tpu_custom_call.1} parent=1 // pred_check
      _
    $region23: #{tpu_custom_call.1} parent=1 // pred_check_branch
      %35 = sbr.rel (0) target = $region25
    $region24: #{tpu_custom_call.1} parent=1 // pred_region
      _
    $region25: #{tpu_custom_call.1} parent=1 // pred_fallthru
      _
    // Predicated region
    $region26: #{tpu_custom_call.1} parent=1 // pred_check
      _
    $region27: #{tpu_custom_call.1} parent=1 // pred_check_branch
      %37 = sbr.rel (0) target = $region29
    $region28: #{tpu_custom_call.1} parent=1 // pred_region
      _
    $region29: #{tpu_custom_call.1} parent=1 // pred_fallthru
      _
    // Predicated region
    $region30: #{tpu_custom_call.1} parent=1 // pred_check
      _
    $region31: #{tpu_custom_call.1} parent=1 // pred_check_branch
      %39 = sbr.rel (0) target = $region33
    $region32: #{tpu_custom_call.1} parent=1 // pred_region
      %40 = dma.done [#allocation3], 512
    $region33: #{tpu_custom_call.1} parent=1 // pred_fallthru
      _
    %v41 = vld [vmem:[%s0] sm:$0x3]
    %v42 = vld [vmem:[%s1] sm:$0xff]
    %v43 = vld [vmem:[%s1 + $0x8] sm:$0xff]
    %v44 = vld [vmem:[%s1 + $0x10] sm:$0xff]
    %v45 = vld [vmem:[%s1 + $0x18] sm:$0xff]
    %v46 = vld [vmem:[%s2] sm:$0x1]
    %v48 = vlaneseq
    %v49 = vshrl.u32 %v48, 7
    %v50 = vsub.s32 0, %v49
    %v51 = vrot.slane %v46, %v50
    %vm53 = vcmask 261120
    %v55 = vsel %vm53, %v41, 0
    %57 = vmatprep.subr.mxu0 0.0
    %58 = vmatpush1.msra.mxu0 0.0
    %59 = vmatprep.subr.mxu0 0.0
    %60 = vmatpush1.msra.mxu0 0.0
    %61 = vmatprep.subr.mxu0 0.0
    %62 = vmatpush1.msra.mxu0 0.0
    %63 = vmatprep.subr.mxu0 0.0
    %64 = vmatpush1.msra.mxu0 0.0
    %65 = vmatprep.subr.mxu0 0.0
    %66 = vmatpush1.msra.mxu0 0.0
    %67 = vmatprep.subr.mxu0 0.0
    %68 = vmatpush1.msra.mxu0 0.0
    %69 = vmatprep.subr.mxu0 0.0
    %70 = vmatpush1.msra.mxu0 0.0
    %71 = vmatprep.subr.mxu0 0.0
    %72 = vmatpush1.msra.mxu0 0.0
    %73 = vmatprep.subr.mxu0 0.0
    %74 = vmatpush1.msra.mxu0 0.0
    %75 = vmatprep.subr.mxu0 0.0
    %76 = vmatpush1.msra.mxu0 0.0
    %77 = vmatprep.subr.mxu0 0.0
    %78 = vmatpush1.msra.mxu0 0.0
    %79 = vmatprep.subr.mxu0 0.0
    %80 = vmatpush1.msra.mxu0 0.0
    %81 = vmatprep.subr.mxu0 0.0
    %82 = vmatpush1.msra.mxu0 %v45
    %83 = vmatprep.subr.mxu0 0.0
    %84 = vmatpush1.msra.mxu0 %v44
    %85 = vmatprep.subr.mxu0 0.0
    %86 = vmatpush1.msra.mxu0 %v43
    %87 = vmatprep.subr.mxu0 0.0
    %88 = vmatpush1.msra.mxu0 %v42
    %89 = vmatprep.subr.mxu0 0.0
    %90 = vmatpush2.msra.mxu0 0.0
    %91 = vmatprep.subr.mxu0 0.0
    %92 = vmatpush2.msra.mxu0 0.0
    %93 = vmatprep.subr.mxu0 0.0
    %94 = vmatpush2.msra.mxu0 0.0
    %95 = vmatprep.subr.mxu0 0.0
    %96 = vmatpush2.msra.mxu0 0.0
    %97 = vmatprep.subr.mxu0 0.0
    %98 = vmatpush2.msra.mxu0 0.0
    %99 = vmatprep.subr.mxu0 0.0
    %100 = vmatpush2.msra.mxu0 0.0
    %101 = vmatprep.subr.mxu0 0.0
    %102 = vmatpush2.msra.mxu0 0.0
    %103 = vmatprep.subr.mxu0 0.0
    %104 = vmatpush2.msra.mxu0 0.0
    %105 = vmatprep.subr.mxu0 0.0
    %106 = vmatpush2.msra.mxu0 0.0
    %107 = vmatprep.subr.mxu0 0.0
    %108 = vmatpush2.msra.mxu0 0.0
    %109 = vmatprep.subr.mxu0 0.0
    %110 = vmatpush2.msra.mxu0 0.0
    %111 = vmatprep.subr.mxu0 0.0
    %112 = vmatpush2.msra.mxu0 0.0
    %113 = vmatprep.subr.mxu0 0.0
    %114 = vmatpush2.msra.mxu0 0.0
    %115 = vmatprep.subr.mxu0 0.0
    %116 = vmatpush2.msra.mxu0 0.0
    %117 = vmatprep.subr.mxu0 0.0
    %118 = vmatpush2.msra.mxu0 0.0
    %119 = vmatprep.subr.mxu0 0.0
    %120 = vmatpush2.msra.mxu0 0.0
    %121 = vmatprep.mubr.f32.mxu0 0.0
    %122 = vmatmul.mubr.f32.gmra.mxu0 %v55
    %v123 = vpop.f32.mrf.mxu0
    %v124 = vadd.f32 %v51, %v123
    %v125 = vpop.f32.mrf.mxu0
    %126 = vdwg.mxu0
    %v127 = vmax.f32 %v124, 0.0
    %v128 = vld [vmem:[#allocation2] sm:$0xff]
    %v129 = vld [vmem:[#allocation2 + $0x8] sm:$0xff]
    %v130 = vld [vmem:[#allocation2 + $0x10] sm:$0xff]
    %v131 = vld [vmem:[#allocation2 + $0x18] sm:$0xff]
    %v132 = vld [vmem:[%s4] sm:$0x1]
    %v134 = vlaneseq
    %v135 = vshrl.u32 %v134, 7
    %v136 = vsub.s32 0, %v135
    %v137 = vrot.slane %v132, %v136
    %v140 = vsel %vm53, %v127, 0
    %142 = vmatprep.subr.mxu0 0.0
    %143 = vmatpush1.msra.mxu0 0.0
    %144 = vmatprep.subr.mxu0 0.0
    %145 = vmatpush1.msra.mxu0 0.0
    %146 = vmatprep.subr.mxu0 0.0
    %147 = vmatpush1.msra.mxu0 0.0
    %148 = vmatprep.subr.mxu0 0.0
    %149 = vmatpush1.msra.mxu0 0.0
    %150 = vmatprep.subr.mxu0 0.0
    %151 = vmatpush1.msra.mxu0 0.0
    %152 = vmatprep.subr.mxu0 0.0
    %153 = vmatpush1.msra.mxu0 0.0
    %154 = vmatprep.subr.mxu0 0.0
    %155 = vmatpush1.msra.mxu0 0.0
    %156 = vmatprep.subr.mxu0 0.0
    %157 = vmatpush1.msra.mxu0 0.0
    %158 = vmatprep.subr.mxu0 0.0
    %159 = vmatpush1.msra.mxu0 0.0
    %160 = vmatprep.subr.mxu0 0.0
    %161 = vmatpush1.msra.mxu0 0.0
    %162 = vmatprep.subr.mxu0 0.0
    %163 = vmatpush1.msra.mxu0 0.0
    %164 = vmatprep.subr.mxu0 0.0
    %165 = vmatpush1.msra.mxu0 0.0
    %166 = vmatprep.subr.mxu0 0.0
    %167 = vmatpush1.msra.mxu0 %v131
    %168 = vmatprep.subr.mxu0 0.0
    %169 = vmatpush1.msra.mxu0 %v130
    %170 = vmatprep.subr.mxu0 0.0
    %171 = vmatpush1.msra.mxu0 %v129
    %172 = vmatprep.subr.mxu0 0.0
    %173 = vmatpush1.msra.mxu0 %v128
    %174 = vmatprep.subr.mxu0 0.0
    %175 = vmatpush2.msra.mxu0 0.0
    %176 = vmatprep.subr.mxu0 0.0
    %177 = vmatpush2.msra.mxu0 0.0
    %178 = vmatprep.subr.mxu0 0.0
    %179 = vmatpush2.msra.mxu0 0.0
    %180 = vmatprep.subr.mxu0 0.0
    %181 = vmatpush2.msra.mxu0 0.0
    %182 = vmatprep.subr.mxu0 0.0
    %183 = vmatpush2.msra.mxu0 0.0
    %184 = vmatprep.subr.mxu0 0.0
    %185 = vmatpush2.msra.mxu0 0.0
    %186 = vmatprep.subr.mxu0 0.0
    %187 = vmatpush2.msra.mxu0 0.0
    %188 = vmatprep.subr.mxu0 0.0
    %189 = vmatpush2.msra.mxu0 0.0
    %190 = vmatprep.subr.mxu0 0.0
    %191 = vmatpush2.msra.mxu0 0.0
    %192 = vmatprep.subr.mxu0 0.0
    %193 = vmatpush2.msra.mxu0 0.0
    %194 = vmatprep.subr.mxu0 0.0
    %195 = vmatpush2.msra.mxu0 0.0
    %196 = vmatprep.subr.mxu0 0.0
    %197 = vmatpush2.msra.mxu0 0.0
    %198 = vmatprep.subr.mxu0 0.0
    %199 = vmatpush2.msra.mxu0 0.0
    %200 = vmatprep.subr.mxu0 0.0
    %201 = vmatpush2.msra.mxu0 0.0
    %202 = vmatprep.subr.mxu0 0.0
    %203 = vmatpush2.msra.mxu0 0.0
    %204 = vmatprep.subr.mxu0 0.0
    %205 = vmatpush2.msra.mxu0 0.0
    %206 = vmatprep.mubr.f32.mxu0 0.0
    %207 = vmatmul.mubr.f32.gmra.mxu0 %v140
    %v208 = vpop.f32.mrf.mxu0
    %v209 = vadd.f32 %v137, %v208
    %v210 = vpop.f32.mrf.mxu0
    %211 = vdwg.mxu0
    %v212 = vmax.f32 %v209, 0.0
    %v213 = vld [vmem:[%s5] sm:$0xff]
    %v214 = vld [vmem:[%s5 + $0x8] sm:$0xff]
    %v215 = vld [vmem:[%s5 + $0x10] sm:$0xff]
    %v216 = vld [vmem:[%s5 + $0x18] sm:$0xff]
    %v217 = vld [vmem:[%s6] sm:$0x1]
    %v219 = vlaneseq
    %v220 = vshrl.u32 %v219, 7
    %v221 = vsub.s32 0, %v220
    %v222 = vrot.slane %v217, %v221
    %v225 = vsel %vm53, %v212, 0
    %227 = vmatprep.subr.mxu0 0.0
    %228 = vmatpush1.msra.mxu0 0.0
    %229 = vmatprep.subr.mxu0 0.0
    %230 = vmatpush1.msra.mxu0 0.0
    %231 = vmatprep.subr.mxu0 0.0
    %232 = vmatpush1.msra.mxu0 0.0
    %233 = vmatprep.subr.mxu0 0.0
    %234 = vmatpush1.msra.mxu0 0.0
    %235 = vmatprep.subr.mxu0 0.0
    %236 = vmatpush1.msra.mxu0 0.0
    %237 = vmatprep.subr.mxu0 0.0
    %238 = vmatpush1.msra.mxu0 0.0
    %239 = vmatprep.subr.mxu0 0.0
    %240 = vmatpush1.msra.mxu0 0.0
    %241 = vmatprep.subr.mxu0 0.0
    %242 = vmatpush1.msra.mxu0 0.0
    %243 = vmatprep.subr.mxu0 0.0
    %244 = vmatpush1.msra.mxu0 0.0
    %245 = vmatprep.subr.mxu0 0.0
    %246 = vmatpush1.msra.mxu0 0.0
    %247 = vmatprep.subr.mxu0 0.0
    %248 = vmatpush1.msra.mxu0 0.0
    %249 = vmatprep.subr.mxu0 0.0
    %250 = vmatpush1.msra.mxu0 0.0
    %251 = vmatprep.subr.mxu0 0.0
    %252 = vmatpush1.msra.mxu0 %v216
    %253 = vmatprep.subr.mxu0 0.0
    %254 = vmatpush1.msra.mxu0 %v215
    %255 = vmatprep.subr.mxu0 0.0
    %256 = vmatpush1.msra.mxu0 %v214
    %257 = vmatprep.subr.mxu0 0.0
    %258 = vmatpush1.msra.mxu0 %v213
    %259 = vmatprep.subr.mxu0 0.0
    %260 = vmatpush2.msra.mxu0 0.0
    %261 = vmatprep.subr.mxu0 0.0
    %262 = vmatpush2.msra.mxu0 0.0
    %263 = vmatprep.subr.mxu0 0.0
    %264 = vmatpush2.msra.mxu0 0.0
    %265 = vmatprep.subr.mxu0 0.0
    %266 = vmatpush2.msra.mxu0 0.0
    %267 = vmatprep.subr.mxu0 0.0
    %268 = vmatpush2.msra.mxu0 0.0
    %269 = vmatprep.subr.mxu0 0.0
    %270 = vmatpush2.msra.mxu0 0.0
    %271 = vmatprep.subr.mxu0 0.0
    %272 = vmatpush2.msra.mxu0 0.0
    %273 = vmatprep.subr.mxu0 0.0
    %274 = vmatpush2.msra.mxu0 0.0
    %275 = vmatprep.subr.mxu0 0.0
    %276 = vmatpush2.msra.mxu0 0.0
    %277 = vmatprep.subr.mxu0 0.0
    %278 = vmatpush2.msra.mxu0 0.0
    %279 = vmatprep.subr.mxu0 0.0
    %280 = vmatpush2.msra.mxu0 0.0
    %281 = vmatprep.subr.mxu0 0.0
    %282 = vmatpush2.msra.mxu0 0.0
    %283 = vmatprep.subr.mxu0 0.0
    %284 = vmatpush2.msra.mxu0 0.0
    %285 = vmatprep.subr.mxu0 0.0
    %286 = vmatpush2.msra.mxu0 0.0
    %287 = vmatprep.subr.mxu0 0.0
    %288 = vmatpush2.msra.mxu0 0.0
    %289 = vmatprep.subr.mxu0 0.0
    %290 = vmatpush2.msra.mxu0 0.0
    %291 = vmatprep.mubr.f32.mxu0 0.0
    %292 = vmatmul.mubr.f32.gmra.mxu0 %v225
    %v293 = vpop.f32.mrf.mxu0
    %v294 = vadd.f32 %v222, %v293
    %v295 = vpop.f32.mrf.mxu0
    %296 = vdwg.mxu0
    %vm297 = vcmask 58368
    %298 = vst.msk [vmem:[#allocation5] sm:$0x3] %vm297, %v294
    // Predicated region
    $region34: #{tpu_custom_call.1} parent=1 // pred_check
      _
    $region35: #{tpu_custom_call.1} parent=1 // pred_check_branch
      %300 = sbr.rel (0) target = $region37
    $region36: #{tpu_custom_call.1} parent=1 // pred_region
      %s302 = ssub.s32 32, 32
      %303 = vsyncadd [#allocation4], %s302
      %s305 = sshll.u32 [#allocation5], 4
      %s306 = int_to_ptr.vmem [resolvable:$true] %s305
      %308 = dma.vmem_to_hbm [thread:$0]  %s306, 32, %s7, [#allocation4]
    $region37: #{tpu_custom_call.1} parent=1 // pred_fallthru
      _
    // Predicated region
    $region38: #{tpu_custom_call.1} parent=1 // pred_check
      _
    $region39: #{tpu_custom_call.1} parent=1 // pred_check_branch
      %310 = sbr.rel (0) target = $region41
    $region40: #{tpu_custom_call.1} parent=1 // pred_region
      %311 = dma.done [#allocation4], 32
    $region41: #{tpu_custom_call.1} parent=1 // pred_fallthru
      _
    %312 = vsyncpa [#allocation3], 1
    %313 = vsyncpa [#allocation4], 1

</llo_original>
